<compile_context>
chip_gen: v5e
topology: v5e:2x2
jax: 0.10.0
libtpu: 0.0.40
codegen_flags: <defaults>
</compile_context>

<pallas_src>
import functools

import jax
import jax.numpy as jnp
from jax.experimental import pallas as pl
from jax.experimental.pallas import tpu as pltpu


def _round_up(x, m):
    return ((x + m - 1) // m) * m


def _vmem_capacity_bytes():
    # Physical VMEM: 128 MiB on v5e/v6e, 64 MiB per TensorCore on v7x.
    try:
        return int(pltpu.get_tpu_info().vmem_capacity_bytes)
    except Exception:
        return 64 << 20  # conservative fallback (v7x per-core size)


def _pick_b_sub(N, Cin, in_itemsize):
    """Fold several batch images per grid step when Cin under-fills sublanes."""
    sublane_pack = max(1, (8 * 4) // in_itemsize)   # 8 rows f32, 16 rows bf16
    if Cin >= sublane_pack:
        return 1
    fold_cap = max(1, sublane_pack // Cin)
    b = 1
    for d in range(1, min(N, fold_cap) + 1):        # largest divisor of N <= cap
        if N % d == 0:
            b = d
    return b


def _pick_hw_tile(HW, b_sub, Cin, Cout, in_itemsize, out_itemsize, vmem_cap):
    """Largest lane-dense divisor of HW keeping double-buffered blocks in VMEM."""
    if HW % 128 != 0:
        return HW                                   # must take the full axis
    per_lane = 2 * b_sub * (Cin * in_itemsize + Cout * out_itemsize)  # 2x buffers
    cap_lanes = max(128, (vmem_cap // 2) // per_lane)  # stay under ~half of VMEM
    target = min(HW, 8192, cap_lanes)               # 2K-8K lanes ~ >=85% roofline
    t = (target // 128) * 128
    while t > 128 and HW % t != 0:
        t -= 128
    return max(t, 128)


# ----------------------------------------------------------------------------
# Kernel: per (batch-group, hw-tile) step, compute W @ x + b for each image.
#   x_ref: (b_sub, Cin, hw_tile)   w_ref: (Cout, Cin)   b_ref: (Cout, 1)
#   o_ref: (b_sub, Cout, hw_tile)
# ----------------------------------------------------------------------------
def _conv1x1_kernel(x_ref, w_ref, b_ref, o_ref):
    w = w_ref[...]
    bias = b_ref[...]
    for i in range(x_ref.shape[0]):                 # static unroll, b_sub small
        acc = jnp.dot(w, x_ref[i], preferred_element_type=jnp.float32)
        o_ref[i] = (acc + bias).astype(o_ref.dtype)  # bias broadcast over lanes


def conv1x1(x_nchw, w_oc_ic, bias_c, *, hw_tile=None):
    """1x1 conv (stride 1) in NCHW layout; output dtype follows input dtype."""
    N, Cin, H, W = x_nchw.shape
    Cout = w_oc_ic.shape[0]
    HW = H * W
    out_dtype = x_nchw.dtype

    in_itemsize = jnp.dtype(x_nchw.dtype).itemsize
    out_itemsize = jnp.dtype(out_dtype).itemsize
    vmem_cap = _vmem_capacity_bytes()

    b_sub = _pick_b_sub(N, Cin, in_itemsize)
    if hw_tile is None:
        hw_tile = _pick_hw_tile(HW, b_sub, Cin, Cout,
                                in_itemsize, out_itemsize, vmem_cap)
    assert HW % hw_tile == 0, (HW, hw_tile)
    assert hw_tile == HW or hw_tile % 128 == 0, hw_tile

    # Keep >= 2 grid steps so both v7x TensorCores get work (no-op on v5e/v6e,
    # and only kicks in when a halved tile is still >= 512 lanes).
    if (N // b_sub) * (HW // hw_tile) < 2:
        half = hw_tile // 2
        if half >= 512 and half % 128 == 0 and HW % half == 0:
            hw_tile = half

    x_flat = x_nchw.reshape(N, Cin, HW)             # contiguous reshape, no copy
    bias_2d = bias_c.reshape(Cout, 1)

    grid = (N // b_sub, HW // hw_tile)

    # VMEM budget: double-buffered x + out blocks, plus padded weight/bias.
    x_blk = b_sub * Cin * hw_tile * in_itemsize
    o_blk = b_sub * Cout * hw_tile * out_itemsize
    w_pad = _round_up(Cout, 8) * _round_up(Cin, 128) * jnp.dtype(w_oc_ic.dtype).itemsize
    b_pad = _round_up(Cout, 8) * 128 * jnp.dtype(bias_c.dtype).itemsize
    vmem_limit = 2 * (x_blk + o_blk) + 2 * (w_pad + b_pad) + (4 << 20)
    vmem_limit = int(min(vmem_cap, max(vmem_limit, 16 << 20)))

    cost = pl.CostEstimate(
        flops=2 * N * Cout * Cin * HW,
        transcendentals=0,
        bytes_accessed=(N * Cin * HW * in_itemsize
                        + N * Cout * HW * out_itemsize
                        + Cout * Cin * jnp.dtype(w_oc_ic.dtype).itemsize
                        + Cout * jnp.dtype(bias_c.dtype).itemsize),
    )

    out = pl.pallas_call(
        _conv1x1_kernel,
        out_shape=jax.ShapeDtypeStruct((N, Cout, HW), out_dtype),
        grid=grid,
        in_specs=[
            pl.BlockSpec((b_sub, Cin, hw_tile), lambda n, t: (n, 0, t)),
            pl.BlockSpec((Cout, Cin), lambda n, t: (0, 0)),
            pl.BlockSpec((Cout, 1), lambda n, t: (0, 0)),
        ],
        out_specs=pl.BlockSpec((b_sub, Cout, hw_tile), lambda n, t: (n, 0, t)),
        compiler_params=pltpu.CompilerParams(
            dimension_semantics=("parallel", "parallel"),
            vmem_limit_bytes=vmem_limit),
        cost_estimate=cost,
    )(x_flat, w_oc_ic, bias_2d)

    return out.reshape(N, Cout, H, W)               # contiguous reshape, no copy


@jax.jit
def out_conv(x_nchw, weight_oihw, bias_c):
    """Matches PyTorch _OutConv.forward: nn.Conv2d(in, out, kernel_size=1)."""
    Cout, Cin, kh, kw = weight_oihw.shape
    assert (kh, kw) == (1, 1), "out_conv only supports 1x1 convolution weights"
    w_oc_ic = weight_oihw.reshape(Cout, Cin)
    return conv1x1(x_nchw, w_oc_ic, bias_c)


# ----------------------------------------------------------------------------
# Pure-JAX reference for a correctness sanity check.
# ----------------------------------------------------------------------------
def _ref_out_conv(x_nchw, weight_oihw, bias_c):
    w = weight_oihw.reshape(weight_oihw.shape[0], weight_oihw.shape[1])
    y = jnp.einsum("nchw,oc->nohw", x_nchw, w)
    return (y + bias_c.reshape(1, -1, 1, 1)).astype(x_nchw.dtype)


if __name__ == "__main__":
    # Small shapes consistent with the module: N=2, Cin=4, Cout=4, 16x16.
    N, Cin, H, W = 2, 4, 16, 16
    Cout = 4

    key = jax.random.PRNGKey(0)
    kx, kw, kb = jax.random.split(key, 3)

    x = jax.random.normal(kx, (N, Cin, H, W), dtype=jnp.float32)
    # PyTorch Conv2d weight layout: (Cout, Cin, 1, 1); bias: (Cout,)
    weight = jax.random.normal(kw, (Cout, Cin, 1, 1), dtype=jnp.float32) * 0.1
    bias = jax.random.normal(kb, (Cout,), dtype=jnp.float32) * 0.1

    out = out_conv(x, weight, bias)
    out = jax.block_until_ready(out)
    assert out.shape == (N, Cout, H, W), out.shape
    assert out.dtype == x.dtype, out.dtype

    ref = _ref_out_conv(x, weight, bias)
    assert jnp.allclose(out, ref, atol=1e-5, rtol=1e-5), float(
        jnp.max(jnp.abs(out - ref)))

    print("KERNEL_OK")
</pallas_src>

<mosaic_0001>
module attributes {stable_mosaic.version = 11 : i64} {
  func.func @_conv1x1_kernel(%arg0: i32, %arg1: i32, %arg2: memref<2x4x256xf32, #tpu.memory_space<vmem>>, %arg3: memref<4x4xf32, #tpu.memory_space<vmem>>, %arg4: memref<4x1xf32, #tpu.memory_space<vmem>>, %arg5: memref<2x4x256xf32, #tpu.memory_space<vmem>>) attributes {dimension_semantics = [#tpu.dimension_semantics<parallel>, #tpu.dimension_semantics<parallel>], iteration_bounds = array<i64: 1, 1>, scalar_prefetch = 0 : i64, scratch_operands = 0 : i64, tpu.core_type = #tpu.core_type<tc>, window_params = [{transform_indices = @transform_0, window_bounds = array<i64: 2, 4, 256>}, {pipeline_mode = #tpu.pipeline_mode<synchronous>, transform_indices = @transform_1, window_bounds = array<i64: 4, 4>}, {pipeline_mode = #tpu.pipeline_mode<synchronous>, transform_indices = @transform_2, window_bounds = array<i64: 4, 1>}, {transform_indices = @transform_3, window_bounds = array<i64: 2, 4, 256>}]} {
    %c0 = arith.constant 0 : index
    %c0_0 = arith.constant 0 : index
    %0 = vector.load %arg3[%c0, %c0_0] : memref<4x4xf32, #tpu.memory_space<vmem>>, vector<4x4xf32>
    %c0_1 = arith.constant 0 : index
    %c0_2 = arith.constant 0 : index
    %1 = vector.load %arg4[%c0_1, %c0_2] : memref<4x1xf32, #tpu.memory_space<vmem>>, vector<4x1xf32>
    %c0_3 = arith.constant 0 : index
    %c0_4 = arith.constant 0 : index
    %c0_5 = arith.constant 0 : index
    %2 = vector.load %arg2[%c0_3, %c0_4, %c0_5] : memref<2x4x256xf32, #tpu.memory_space<vmem>>, vector<1x4x256xf32>
    %3 = vector.shape_cast %2 : vector<1x4x256xf32> to vector<4x256xf32>
    %cst = arith.constant dense<0.000000e+00> : vector<4x256xf32>
    %4 = tpu.matmul %0, %3, %cst {dimension_numbers = #tpu.dot_dimension_numbers<[1], [0], [0], [1], [0, 0, 1, 1], [], []>} : vector<4x4xf32>, vector<4x256xf32>, vector<4x256xf32> -> vector<4x256xf32>
    %5 = vector.broadcast %1 : vector<4x1xf32> to vector<4x256xf32>
    %6 = arith.addf %4, %5 : vector<4x256xf32>
    %c0_6 = arith.constant 0 : index
    %c0_7 = arith.constant 0 : index
    %c0_8 = arith.constant 0 : index
    %7 = vector.load %arg5[%c0_6, %c0_7, %c0_8] : memref<2x4x256xf32, #tpu.memory_space<vmem>>, vector<1x4x256xf32>
    %8 = vector.shape_cast %7 : vector<1x4x256xf32> to vector<4x256xf32>
    %9 = vector.shape_cast %6 : vector<4x256xf32> to vector<1x4x256xf32>
    tpu.vector_store %arg5[%c0_6, %c0_7, %c0_8], %9 {strides = array<i32>} : memref<2x4x256xf32, #tpu.memory_space<vmem>>, vector<1x4x256xf32>,
    %c1 = arith.constant 1 : index
    %c0_9 = arith.constant 0 : index
    %c0_10 = arith.constant 0 : index
    %10 = vector.load %arg2[%c1, %c0_9, %c0_10] : memref<2x4x256xf32, #tpu.memory_space<vmem>>, vector<1x4x256xf32>
    %11 = vector.shape_cast %10 : vector<1x4x256xf32> to vector<4x256xf32>
    %cst_11 = arith.constant dense<0.000000e+00> : vector<4x256xf32>
    %12 = tpu.matmul %0, %11, %cst_11 {dimension_numbers = #tpu.dot_dimension_numbers<[1], [0], [0], [1], [0, 0, 1, 1], [], []>} : vector<4x4xf32>, vector<4x256xf32>, vector<4x256xf32> -> vector<4x256xf32>
    %13 = vector.broadcast %1 : vector<4x1xf32> to vector<4x256xf32>
    %14 = arith.addf %12, %13 : vector<4x256xf32>
    %c1_12 = arith.constant 1 : index
    %c0_13 = arith.constant 0 : index
    %c0_14 = arith.constant 0 : index
    %15 = vector.load %arg5[%c1_12, %c0_13, %c0_14] : memref<2x4x256xf32, #tpu.memory_space<vmem>>, vector<1x4x256xf32>
    %16 = vector.shape_cast %15 : vector<1x4x256xf32> to vector<4x256xf32>
    %17 = vector.shape_cast %14 : vector<4x256xf32> to vector<1x4x256xf32>
    tpu.vector_store %arg5[%c1_12, %c0_13, %c0_14], %17 {strides = array<i32>} : memref<2x4x256xf32, #tpu.memory_space<vmem>>, vector<1x4x256xf32>,
    return
  }
  func.func @transform_0(%arg0: i32, %arg1: i32) -> (i32, i32, i32) {
    %c0_i32 = arith.constant 0 : i32
    %c0_i32_0 = arith.constant 0 : i32
    return %arg0, %c0_i32, %arg1 : i32, i32, i32
  }
  func.func @transform_1(%arg0: i32, %arg1: i32) -> (i32, i32) {
    %c0_i32 = arith.constant 0 : i32
    %c0_i32_0 = arith.constant 0 : i32
    %c0_i32_1 = arith.constant 0 : i32
    return %c0_i32, %c0_i32_0 : i32, i32
  }
  func.func @transform_2(%arg0: i32, %arg1: i32) -> (i32, i32) {
    %c0_i32 = arith.constant 0 : i32
    %c0_i32_0 = arith.constant 0 : i32
    %c0_i32_1 = arith.constant 0 : i32
    return %c0_i32, %c0_i32_0 : i32, i32
  }
  func.func @transform_3(%arg0: i32, %arg1: i32) -> (i32, i32, i32) {
    %c0_i32 = arith.constant 0 : i32
    %c0_i32_0 = arith.constant 0 : i32
    return %arg0, %c0_i32, %arg1 : i32, i32, i32
  }
}

</mosaic_0001>

<llo_original>
// kernel: out_conv.1
$region0: #{out_conv.1}
  #allocation0 [shape = 'u32[]', space=smem, size = 0x4, offset = 0x4, fixed_abs, tag = 'smem constant byte address 0x4 - core index']
  #allocation1 [shape = 'u32[72,128]{1,0:T(1,128)}', space=vmem, size = 0x9000, scoped, tag = 'internal scratch']
  %s0 = inlined_call_operand.vmem [shape: f32[2,4,256], index: 0, kind: input, shape index: {}]
  %s1 = inlined_call_operand.vmem [shape: f32[4,4], index: 1, kind: input, shape index: {}]
  %s2 = inlined_call_operand.vmem [shape: f32[4,1], index: 2, kind: input, shape index: {}]
  %s3 = inlined_call_operand.vmem [shape: f32[2,4,256], index: 3, kind: output, shape index: {}]
  %s4 = sld [smem:[#allocation0]]
  $region22: #{out_conv.1} parent=0
    _
  %s6 = ssub.s32 1, %s4
  %s7 = scalar_select 0, %s6, %s4
  // Predicated region
  $region2: #{out_conv.1} parent=0 // pred_check
    _
  $region3: #{out_conv.1} parent=0 // pred_check_branch
    %9 = sbr.rel (0) target = $region5
  $region4: #{out_conv.1} parent=0 // pred_region
    _
  $region5: #{out_conv.1} parent=0 // pred_fallthru
    _
  // Predicated region
  $region6: #{out_conv.1} parent=0 // pred_check
    _
  $region7: #{out_conv.1} parent=0 // pred_check_branch
    %11 = sbr.rel (0) target = $region9
  $region8: #{out_conv.1} parent=0 // pred_region
    _
  $region9: #{out_conv.1} parent=0 // pred_fallthru
    _
  // Predicated region
  $region10: #{out_conv.1} parent=0 // pred_check
    _
  $region11: #{out_conv.1} parent=0 // pred_check_branch
    %13 = sbr.rel (0) target = $region13
  $region12: #{out_conv.1} parent=0 // pred_region
    _
  $region13: #{out_conv.1} parent=0 // pred_fallthru
    _
  %v14 = vld [vmem:[%s1] sm:$0xf]
  %v15 = vld [vmem:[%s2] sm:$0xf]
  %v16 = vld [vmem:[%s0] sm:$0xff]
  %18 = vset.pattern.permute.xlu0 0
  %19 = vperm.xlu0 %18, %v15
  %v20 = vpop.permute.xlu0 %19
  %23 = vst [vmem:[#allocation1] ss:$2 sm:$0xff] %v16
  %v24 = vld.sshfl [vmem:[#allocation1] sm:$0xff pattern:$0x75316420]
  %v25 = vld.sshfl [vmem:[#allocation1 + $0x8] sm:$0xff pattern:$0x75316420]
  %vm26 = vcmask 31744
  %v28 = vsel %vm26, %v14, 0
  %vm30 = vcmask 1043456
  %v31 = vsel %vm30, %v24, 0
  %v33 = vsel %vm30, %v25, 0
  %35 = vmatpush.msra.mxu0 0.0
  %36 = vmatpush.msra.mxu0 0.0
  %37 = vmatpush.msra.mxu0 0.0
  %38 = vmatpush.msra.mxu0 0.0
  %39 = vmatpush.msra.mxu0 0.0
  %40 = vmatpush.msra.mxu0 0.0
  %41 = vmatpush.msra.mxu0 0.0
  %42 = vmatpush.msra.mxu0 0.0
  %43 = vmatpush.msra.mxu0 0.0
  %44 = vmatpush.msra.mxu0 0.0
  %45 = vmatpush.msra.mxu0 0.0
  %46 = vmatpush.msra.mxu0 0.0
  %47 = vmatpush.msra.mxu0 0.0
  %48 = vmatpush.msra.mxu0 0.0
  %49 = vmatpush.msra.mxu0 0.0
  %50 = vmatpush.msra.mxu0 %v31
  %51 = vmatmul.f32.gmra.mxu0 %v28
  %v52 = vpop.f32.mrf.mxu0
  %v53 = vadd.f32 %v20, %v52
  %54 = vdwg.mxu0
  %55 = vmatpush.msra.mxu0 0.0
  %56 = vmatpush.msra.mxu0 0.0
  %57 = vmatpush.msra.mxu0 0.0
  %58 = vmatpush.msra.mxu0 0.0
  %59 = vmatpush.msra.mxu0 0.0
  %60 = vmatpush.msra.mxu0 0.0
  %61 = vmatpush.msra.mxu0 0.0
  %62 = vmatpush.msra.mxu0 0.0
  %63 = vmatpush.msra.mxu0 0.0
  %64 = vmatpush.msra.mxu0 0.0
  %65 = vmatpush.msra.mxu0 0.0
  %66 = vmatpush.msra.mxu0 0.0
  %67 = vmatpush.msra.mxu0 0.0
  %68 = vmatpush.msra.mxu0 0.0
  %69 = vmatpush.msra.mxu0 0.0
  %70 = vmatpush.msra.mxu0 %v33
  %71 = vmatmul.f32.gmra.mxu0 %v28
  %v72 = vpop.f32.mrf.mxu0
  %v73 = vadd.f32 %v20, %v72
  %74 = vdwg.mxu0
  %v77 = vrot.slane %v73, 4
  %v78 = vsel %vm30, %v53, %v77
  %80 = vst [vmem:[%s3] sm:$0xff] %v78
  %s81 = scalar_lea.vmem %s0, 8
  %v82 = vld [vmem:[%s81] sm:$0xff]
  %84 = vst [vmem:[#allocation1] ss:$2 sm:$0xff] %v82
  %v85 = vld.sshfl [vmem:[#allocation1] sm:$0xff pattern:$0x75316420]
  %v86 = vld.sshfl [vmem:[#allocation1 + $0x8] sm:$0xff pattern:$0x75316420]
  %v87 = vsel %vm30, %v85, 0
  %v89 = vsel %vm30, %v86, 0
  %91 = vmatpush.msra.mxu0 0.0
  %92 = vmatpush.msra.mxu0 0.0
  %93 = vmatpush.msra.mxu0 0.0
  %94 = vmatpush.msra.mxu0 0.0
  %95 = vmatpush.msra.mxu0 0.0
  %96 = vmatpush.msra.mxu0 0.0
  %97 = vmatpush.msra.mxu0 0.0
  %98 = vmatpush.msra.mxu0 0.0
  %99 = vmatpush.msra.mxu0 0.0
  %100 = vmatpush.msra.mxu0 0.0
  %101 = vmatpush.msra.mxu0 0.0
  %102 = vmatpush.msra.mxu0 0.0
  %103 = vmatpush.msra.mxu0 0.0
  %104 = vmatpush.msra.mxu0 0.0
  %105 = vmatpush.msra.mxu0 0.0
  %106 = vmatpush.msra.mxu0 %v87
  %107 = vmatmul.f32.gmra.mxu0 %v28
  %v108 = vpop.f32.mrf.mxu0
  %v109 = vadd.f32 %v20, %v108
  %110 = vdwg.mxu0
  %111 = vmatpush.msra.mxu0 0.0
  %112 = vmatpush.msra.mxu0 0.0
  %113 = vmatpush.msra.mxu0 0.0
  %114 = vmatpush.msra.mxu0 0.0
  %115 = vmatpush.msra.mxu0 0.0
  %116 = vmatpush.msra.mxu0 0.0
  %117 = vmatpush.msra.mxu0 0.0
  %118 = vmatpush.msra.mxu0 0.0
  %119 = vmatpush.msra.mxu0 0.0
  %120 = vmatpush.msra.mxu0 0.0
  %121 = vmatpush.msra.mxu0 0.0
  %122 = vmatpush.msra.mxu0 0.0
  %123 = vmatpush.msra.mxu0 0.0
  %124 = vmatpush.msra.mxu0 0.0
  %125 = vmatpush.msra.mxu0 0.0
  %126 = vmatpush.msra.mxu0 %v89
  %127 = vmatmul.f32.gmra.mxu0 %v28
  %v128 = vpop.f32.mrf.mxu0
  %v129 = vadd.f32 %v20, %v128
  %130 = vdwg.mxu0
  %v133 = vrot.slane %v129, 4
  %v134 = vsel %vm30, %v109, %v133
  %s136 = scalar_lea.vmem %s3, 8
  %137 = vst [vmem:[%s136] sm:$0xff] %v134
  // Predicated region
  $region14: #{out_conv.1} parent=0 // pred_check
    _
  $region15: #{out_conv.1} parent=0 // pred_check_branch
    %139 = sbr.rel (0) target = $region17
  $region16: #{out_conv.1} parent=0 // pred_region
    _
  $region17: #{out_conv.1} parent=0 // pred_fallthru
    _
  // Predicated region
  $region18: #{out_conv.1} parent=0 // pred_check
    _
  $region19: #{out_conv.1} parent=0 // pred_check_branch
    %141 = sbr.rel (0) target = $region21
  $region20: #{out_conv.1} parent=0 // pred_region
    _
  $region21: #{out_conv.1} parent=0 // pred_fallthru
    _

</llo_original>
